<compile_context>
chip_gen: v7x
topology: tpu7x:2x2x1
jax: 0.10.0
libtpu: 0.0.40
codegen_flags: <defaults>
</compile_context>

<pallas_src>
import functools

import jax
import jax.numpy as jnp
from jax.experimental import pallas as pl
from jax.experimental.pallas import tpu as pltpu


def _round_up(v, m):
    return ((v + m - 1) // m) * m


def _make_kernel(N, C, KH, KW, W_pad, dilation, M1p, OC_p, apply_relu):
    offsets = tuple(kh * dilation * W_pad + kw * dilation
                    for kh in range(KH) for kw in range(KW))

    def kernel(x_ref, w_ref, b_ref, o_ref):
        # x_ref: (N, C, L)        compute dtype, row-flattened padded images
        # w_ref: (OC_p, KH*KW*C)  compute dtype, BN scale folded in
        # b_ref: (OC_p, 1)        f32 folded BN (+conv) bias
        # o_ref: (N, OC_p, M1p)   channels on sublanes, spatial on lanes
        xs = [x_ref[n] for n in range(N)]                    # each (C, L)

        # im2col slab built in VMEM: taps x channels on the sublane axis,
        # batch x flattened-spatial on the lane axis.
        taps = []
        for off in offsets:
            taps.append(jnp.concatenate(
                [jax.lax.slice(xn, (0, off), (C, off + M1p)) for xn in xs],
                axis=-1))                                    # (C, N*M1p)
        slab = jnp.concatenate(taps, axis=0)                 # (KH*KW*C, N*M1p)

        # Single MXU matmul; accumulation happens in f32 inside the MXU.
        y = jnp.dot(w_ref[...], slab, preferred_element_type=jnp.float32)
        y = y + b_ref[...]                                   # folded BN bias
        if apply_relu:
            y = jnp.maximum(y, 0.0)

        # Lane-aligned per-batch stores (n * M1p is a multiple of 128).
        for n in range(N):
            o_ref[n] = jax.lax.slice(
                y, (0, n * M1p), (OC_p, (n + 1) * M1p)).astype(o_ref.dtype)

    return kernel


def basic_conv_forward(x, weight, gamma, beta, run_mean, run_var, *,
                       conv_bias=None, stride=1, padding=0, dilation=1,
                       eps=1e-5, relu=True, bn=True,
                       compute_dtype=jnp.bfloat16, out_dtype=jnp.float32):
    """Forward pass of BasicConv. x: (N, C, H, W). Returns (N, OC, OH, OW)."""
    N, C, H, W = x.shape
    OC, Cg, KH, KW = weight.shape
    assert Cg == C, "groups != 1 not supported"  # TODO(synk): grouped conv

    H_pad = H + 2 * padding
    W_pad = W + 2 * padding
    # stride-1 ("dense") output extents; stride > 1 subsamples afterwards.
    OH1 = H_pad - dilation * (KH - 1)
    OW1 = W_pad - dilation * (KW - 1)
    assert OH1 >= 1 and OW1 >= 1, "kernel larger than padded input"

    # ---- fold BatchNorm (inference / running stats) and conv bias ----
    if bn:
        scale = (gamma / jnp.sqrt(run_var + eps)).astype(jnp.float32)
        bias = beta.astype(jnp.float32) - run_mean.astype(jnp.float32) * scale
    else:
        scale = jnp.ones((OC,), jnp.float32)
        bias = jnp.zeros((OC,), jnp.float32)
    if conv_bias is not None:
        bias = bias + conv_bias.astype(jnp.float32) * scale

    # Conv is linear: BN scale folds exactly into the weight.  Pack as one
    # dense 2D matrix, tap-major / channel-minor, matching the slab rows.
    w = weight.astype(jnp.float32) * scale[:, None, None, None]    # (OC,C,KH,KW)
    w2 = w.transpose(0, 2, 3, 1).reshape(OC, KH * KW * C)          # (OC, KH*KW*C)

    # Channels ride the sublane axis -> pad OC to a multiple of 8 (not 128).
    OC_p = _round_up(OC, 8)
    if OC_p != OC:
        w2 = jnp.pad(w2, ((0, OC_p - OC), (0, 0)))
        bias = jnp.pad(bias, (0, OC_p - OC))
    w2 = w2.astype(compute_dtype)
    bias2d = bias.reshape(OC_p, 1)

    # ---- flattened-row geometry; spatial rides the lane axis ----
    M1 = OH1 * W_pad                      # dense output cols (incl. row tails)
    M1p = _round_up(M1, 128)              # lane-dense output width per batch
    off_max = dilation * (KH - 1) * W_pad + dilation * (KW - 1)
    L = off_max + M1p                     # flat length every tap can slice
    extra_rows = max(0, -(-L // W_pad) - H_pad)
    L_eff = (H_pad + extra_rows) * W_pad  # >= L

    # Single fused host pass: cast + spatial pad + tail pad, then a free
    # row-flatten reshape.  Input stays NCHW-derived; no transposes.
    x2 = jnp.pad(x.astype(compute_dtype),
                 ((0, 0), (0, 0),
                  (padding, padding + extra_rows),
                  (padding, padding))).reshape(N, C, L_eff)

    kernel = _make_kernel(N, C, KH, KW, W_pad, dilation, M1p, OC_p, relu)

    flops = 2 * OC_p * (KH * KW * C) * (N * M1p)
    bytes_accessed = (x2.size * x2.dtype.itemsize
                      + w2.size * w2.dtype.itemsize
                      + bias2d.size * 4
                      + N * OC_p * M1p * jnp.dtype(out_dtype).itemsize)

    out_p = pl.pallas_call(
        kernel,
        out_shape=jax.ShapeDtypeStruct((N, OC_p, M1p), out_dtype),
        grid_spec=pltpu.PrefetchScalarGridSpec(
            num_scalar_prefetch=0,
            grid=(1,),                                       # one wide step
            in_specs=[
                pl.BlockSpec((N, C, L_eff), lambda i: (0, 0, 0)),       # image
                pl.BlockSpec((OC_p, KH * KW * C), lambda i: (0, 0)),    # weight
                pl.BlockSpec((OC_p, 1), lambda i: (0, 0)),              # bias
            ],
            out_specs=pl.BlockSpec((N, OC_p, M1p), lambda i: (0, 0, 0)),
        ),
        compiler_params=pltpu.CompilerParams(
            dimension_semantics=("arbitrary",)),
        cost_estimate=pl.CostEstimate(flops=flops, transcendentals=0,
                                      bytes_accessed=bytes_accessed),
    )(x2, w2, bias2d)

    # Valid region: first OC channels, first OW1 columns of each W_pad row.
    out = out_p[:, :OC, :M1].reshape(N, OC, OH1, W_pad)[:, :, :, :OW1]
    out = out.astype(jnp.float32)
    if stride > 1:
        out = out[:, :, ::stride, ::stride]   # TODO(synk): dense-path stride
    return out


def _reference(x, weight, gamma, beta, run_mean, run_var, *,
               stride, padding, dilation, eps, relu, bn):
    y = jax.lax.conv_general_dilated(
        x, weight,
        window_strides=(stride, stride),
        padding=[(padding, padding), (padding, padding)],
        rhs_dilation=(dilation, dilation),
        dimension_numbers=("NCHW", "OIHW", "NCHW"))
    if bn:
        s = (gamma / jnp.sqrt(run_var + eps)).reshape(1, -1, 1, 1)
        b = (beta - run_mean * gamma / jnp.sqrt(run_var + eps)).reshape(1, -1, 1, 1)
        y = y * s + b
    if relu:
        y = jnp.maximum(y, 0.0)
    return y


if __name__ == "__main__":
    # BasicConv(in_planes=4, out_planes=8, kernel_size=3, stride=1, padding=1)
    N, C, H, W = 2, 4, 16, 16
    OC, KH, KW = 8, 3, 3
    stride, padding, dilation, eps = 1, 1, 1, 1e-5

    key = jax.random.PRNGKey(0)
    kx, kwt, kg, kb, km, kv = jax.random.split(key, 6)

    x = jax.random.normal(kx, (N, C, H, W), dtype=jnp.float32)
    weight = jax.random.normal(kwt, (OC, C, KH, KW), dtype=jnp.float32) * 0.1
    gamma = 1.0 + 0.1 * jax.random.normal(kg, (OC,), dtype=jnp.float32)
    beta = 0.1 * jax.random.normal(kb, (OC,), dtype=jnp.float32)
    run_mean = 0.1 * jax.random.normal(km, (OC,), dtype=jnp.float32)
    run_var = jnp.abs(1.0 + 0.1 * jax.random.normal(kv, (OC,), dtype=jnp.float32))

    fwd = functools.partial(basic_conv_forward,
                            stride=stride, padding=padding, dilation=dilation,
                            eps=eps, relu=True, bn=True)

    ref = _reference(x, weight, gamma, beta, run_mean, run_var,
                     stride=stride, padding=padding, dilation=dilation,
                     eps=eps, relu=True, bn=True)

    # f32 path: tight check of the kernel math against the module semantics.
    out_f32 = jax.block_until_ready(
        fwd(x, weight, gamma, beta, run_mean, run_var,
            compute_dtype=jnp.float32))
    assert out_f32.shape == (N, OC, H, W)
    assert jnp.allclose(out_f32, ref, atol=1e-4, rtol=1e-4)

    # bf16 fast path (deployment dtype): tolerance loosened only because the
    # *operands* are bf16-rounded; accumulation stays f32 on the MXU.
    out_bf16 = jax.block_until_ready(
        fwd(x, weight, gamma, beta, run_mean, run_var,
            compute_dtype=jnp.bfloat16))
    assert out_bf16.shape == (N, OC, H, W)
    assert jnp.allclose(out_bf16, ref, atol=5e-2, rtol=5e-2)

    print("KERNEL_OK")
</pallas_src>

<mosaic_0001>
module attributes {stable_mosaic.version = 11 : i64} {
  func.func @kernel(%arg0: i32, %arg1: memref<2x4x432xf32, #tpu.memory_space<vmem>>, %arg2: memref<8x36xf32, #tpu.memory_space<vmem>>, %arg3: memref<8x1xf32, #tpu.memory_space<vmem>>, %arg4: memref<2x8x384xf32, #tpu.memory_space<vmem>>) attributes {dimension_semantics = [#tpu.dimension_semantics<arbitrary>], iteration_bounds = array<i64: 1>, scalar_prefetch = 0 : i64, scratch_operands = 0 : i64, tpu.core_type = #tpu.core_type<tc>, window_params = [{pipeline_mode = #tpu.pipeline_mode<synchronous>, transform_indices = @transform_0, window_bounds = array<i64: 2, 4, 432>}, {pipeline_mode = #tpu.pipeline_mode<synchronous>, transform_indices = @transform_1, window_bounds = array<i64: 8, 36>}, {pipeline_mode = #tpu.pipeline_mode<synchronous>, transform_indices = @transform_2, window_bounds = array<i64: 8, 1>}, {pipeline_mode = #tpu.pipeline_mode<synchronous>, transform_indices = @transform_3, window_bounds = array<i64: 2, 8, 384>}]} {
    %c0 = arith.constant 0 : index
    %c0_0 = arith.constant 0 : index
    %c0_1 = arith.constant 0 : index
    %0 = vector.load %arg1[%c0, %c0_0, %c0_1] : memref<2x4x432xf32, #tpu.memory_space<vmem>>, vector<1x4x432xf32>
    %1 = vector.shape_cast %0 : vector<1x4x432xf32> to vector<4x432xf32>
    %c1 = arith.constant 1 : index
    %c0_2 = arith.constant 0 : index
    %c0_3 = arith.constant 0 : index
    %2 = vector.load %arg1[%c1, %c0_2, %c0_3] : memref<2x4x432xf32, #tpu.memory_space<vmem>>, vector<1x4x432xf32>
    %3 = vector.shape_cast %2 : vector<1x4x432xf32> to vector<4x432xf32>
    %4 = vector.extract_strided_slice %1 {offsets = [0, 0], sizes = [4, 384], strides = [1, 1]} : vector<4x432xf32> to vector<4x384xf32>
    %5 = vector.extract_strided_slice %3 {offsets = [0, 0], sizes = [4, 384], strides = [1, 1]} : vector<4x432xf32> to vector<4x384xf32>
    %6 = tpu.concatenate %4, %5 in 1 : vector<4x384xf32>, vector<4x384xf32> -> vector<4x768xf32>
    %7 = vector.extract_strided_slice %1 {offsets = [0, 1], sizes = [4, 384], strides = [1, 1]} : vector<4x432xf32> to vector<4x384xf32>
    %8 = vector.extract_strided_slice %3 {offsets = [0, 1], sizes = [4, 384], strides = [1, 1]} : vector<4x432xf32> to vector<4x384xf32>
    %9 = tpu.concatenate %7, %8 in 1 : vector<4x384xf32>, vector<4x384xf32> -> vector<4x768xf32>
    %10 = vector.extract_strided_slice %1 {offsets = [0, 2], sizes = [4, 384], strides = [1, 1]} : vector<4x432xf32> to vector<4x384xf32>
    %11 = vector.extract_strided_slice %3 {offsets = [0, 2], sizes = [4, 384], strides = [1, 1]} : vector<4x432xf32> to vector<4x384xf32>
    %12 = tpu.concatenate %10, %11 in 1 : vector<4x384xf32>, vector<4x384xf32> -> vector<4x768xf32>
    %13 = vector.extract_strided_slice %1 {offsets = [0, 18], sizes = [4, 384], strides = [1, 1]} : vector<4x432xf32> to vector<4x384xf32>
    %14 = vector.extract_strided_slice %3 {offsets = [0, 18], sizes = [4, 384], strides = [1, 1]} : vector<4x432xf32> to vector<4x384xf32>
    %15 = tpu.concatenate %13, %14 in 1 : vector<4x384xf32>, vector<4x384xf32> -> vector<4x768xf32>
    %16 = vector.extract_strided_slice %1 {offsets = [0, 19], sizes = [4, 384], strides = [1, 1]} : vector<4x432xf32> to vector<4x384xf32>
    %17 = vector.extract_strided_slice %3 {offsets = [0, 19], sizes = [4, 384], strides = [1, 1]} : vector<4x432xf32> to vector<4x384xf32>
    %18 = tpu.concatenate %16, %17 in 1 : vector<4x384xf32>, vector<4x384xf32> -> vector<4x768xf32>
    %19 = vector.extract_strided_slice %1 {offsets = [0, 20], sizes = [4, 384], strides = [1, 1]} : vector<4x432xf32> to vector<4x384xf32>
    %20 = vector.extract_strided_slice %3 {offsets = [0, 20], sizes = [4, 384], strides = [1, 1]} : vector<4x432xf32> to vector<4x384xf32>
    %21 = tpu.concatenate %19, %20 in 1 : vector<4x384xf32>, vector<4x384xf32> -> vector<4x768xf32>
    %22 = vector.extract_strided_slice %1 {offsets = [0, 36], sizes = [4, 384], strides = [1, 1]} : vector<4x432xf32> to vector<4x384xf32>
    %23 = vector.extract_strided_slice %3 {offsets = [0, 36], sizes = [4, 384], strides = [1, 1]} : vector<4x432xf32> to vector<4x384xf32>
    %24 = tpu.concatenate %22, %23 in 1 : vector<4x384xf32>, vector<4x384xf32> -> vector<4x768xf32>
    %25 = vector.extract_strided_slice %1 {offsets = [0, 37], sizes = [4, 384], strides = [1, 1]} : vector<4x432xf32> to vector<4x384xf32>
    %26 = vector.extract_strided_slice %3 {offsets = [0, 37], sizes = [4, 384], strides = [1, 1]} : vector<4x432xf32> to vector<4x384xf32>
    %27 = tpu.concatenate %25, %26 in 1 : vector<4x384xf32>, vector<4x384xf32> -> vector<4x768xf32>
    %28 = vector.extract_strided_slice %1 {offsets = [0, 38], sizes = [4, 384], strides = [1, 1]} : vector<4x432xf32> to vector<4x384xf32>
    %29 = vector.extract_strided_slice %3 {offsets = [0, 38], sizes = [4, 384], strides = [1, 1]} : vector<4x432xf32> to vector<4x384xf32>
    %30 = tpu.concatenate %28, %29 in 1 : vector<4x384xf32>, vector<4x384xf32> -> vector<4x768xf32>
    %31 = tpu.concatenate %6, %9, %12, %15, %18, %21, %24, %27, %30 in 0 : vector<4x768xf32>, vector<4x768xf32>, vector<4x768xf32>, vector<4x768xf32>, vector<4x768xf32>, vector<4x768xf32>, vector<4x768xf32>, vector<4x768xf32>, vector<4x768xf32> -> vector<36x768xf32>
    %c0_4 = arith.constant 0 : index
    %c0_5 = arith.constant 0 : index
    %32 = vector.load %arg2[%c0_4, %c0_5] : memref<8x36xf32, #tpu.memory_space<vmem>>, vector<8x36xf32>
    %cst = arith.constant dense<0.000000e+00> : vector<8x768xf32>
    %33 = tpu.matmul %32, %31, %cst {dimension_numbers = #tpu.dot_dimension_numbers<[1], [0], [0], [1], [0, 0, 1, 1], [], []>} : vector<8x36xf32>, vector<36x768xf32>, vector<8x768xf32> -> vector<8x768xf32>
    %c0_6 = arith.constant 0 : index
    %c0_7 = arith.constant 0 : index
    %34 = vector.load %arg3[%c0_6, %c0_7] : memref<8x1xf32, #tpu.memory_space<vmem>>, vector<8x1xf32>
    %35 = vector.broadcast %34 : vector<8x1xf32> to vector<8x768xf32>
    %36 = arith.addf %33, %35 : vector<8x768xf32>
    %cst_8 = arith.constant 0.000000e+00 : f32
    %37 = vector.broadcast %cst_8 : f32 to vector<8x768xf32>
    %38 = arith.maximumf %36, %37 : vector<8x768xf32>
    %39 = vector.extract_strided_slice %38 {offsets = [0, 0], sizes = [8, 384], strides = [1, 1]} : vector<8x768xf32> to vector<8x384xf32>
    %c0_9 = arith.constant 0 : index
    %c0_10 = arith.constant 0 : index
    %c0_11 = arith.constant 0 : index
    %40 = vector.load %arg4[%c0_9, %c0_10, %c0_11] : memref<2x8x384xf32, #tpu.memory_space<vmem>>, vector<1x8x384xf32>
    %41 = vector.shape_cast %40 : vector<1x8x384xf32> to vector<8x384xf32>
    %42 = vector.shape_cast %39 : vector<8x384xf32> to vector<1x8x384xf32>
    tpu.vector_store %arg4[%c0_9, %c0_10, %c0_11], %42 {strides = array<i32>} : memref<2x8x384xf32, #tpu.memory_space<vmem>>, vector<1x8x384xf32>,
    %43 = vector.extract_strided_slice %38 {offsets = [0, 384], sizes = [8, 384], strides = [1, 1]} : vector<8x768xf32> to vector<8x384xf32>
    %c1_12 = arith.constant 1 : index
    %c0_13 = arith.constant 0 : index
    %c0_14 = arith.constant 0 : index
    %44 = vector.load %arg4[%c1_12, %c0_13, %c0_14] : memref<2x8x384xf32, #tpu.memory_space<vmem>>, vector<1x8x384xf32>
    %45 = vector.shape_cast %44 : vector<1x8x384xf32> to vector<8x384xf32>
    %46 = vector.shape_cast %43 : vector<8x384xf32> to vector<1x8x384xf32>
    tpu.vector_store %arg4[%c1_12, %c0_13, %c0_14], %46 {strides = array<i32>} : memref<2x8x384xf32, #tpu.memory_space<vmem>>, vector<1x8x384xf32>,
    return
  }
  func.func @transform_0(%arg0: i32) -> (i32, i32, i32) {
    %c0_i32 = arith.constant 0 : i32
    %c0_i32_0 = arith.constant 0 : i32
    %c0_i32_1 = arith.constant 0 : i32
    %c0_i32_2 = arith.constant 0 : i32
    return %c0_i32, %c0_i32_0, %c0_i32_1 : i32, i32, i32
  }
  func.func @transform_1(%arg0: i32) -> (i32, i32) {
    %c0_i32 = arith.constant 0 : i32
    %c0_i32_0 = arith.constant 0 : i32
    %c0_i32_1 = arith.constant 0 : i32
    return %c0_i32, %c0_i32_0 : i32, i32
  }
  func.func @transform_2(%arg0: i32) -> (i32, i32) {
    %c0_i32 = arith.constant 0 : i32
    %c0_i32_0 = arith.constant 0 : i32
    %c0_i32_1 = arith.constant 0 : i32
    return %c0_i32, %c0_i32_0 : i32, i32
  }
  func.func @transform_3(%arg0: i32) -> (i32, i32, i32) {
    %c0_i32 = arith.constant 0 : i32
    %c0_i32_0 = arith.constant 0 : i32
    %c0_i32_1 = arith.constant 0 : i32
    %c0_i32_2 = arith.constant 0 : i32
    return %c0_i32, %c0_i32_0, %c0_i32_1 : i32, i32, i32
  }
}

</mosaic_0001>

<llo_original>
// kernel: tpu_custom_call.1
$region0: #{tpu_custom_call.1}
  #allocation0 [shape = 'u32[]', space=smem, size = 0x4, offset = 0x4, fixed_abs, tag = 'smem constant byte address 0x4 - core index']
  #allocation1 [shape = 'u32[144,128]{1,0:T(1,128)}', space=vmem, size = 0x12000, scoped, tag = 'internal scratch']
  %s0 = inlined_call_operand.hbm [shape: f32[2,4,432], index: 0, kind: input, shape index: {}]
  %s1 = inlined_call_operand.vmem [shape: f32[8,36], index: 1, kind: input, shape index: {}]
  %s2 = inlined_call_operand.vmem [shape: f32[8,1], index: 2, kind: input, shape index: {}]
  %s3 = inlined_call_operand.hbm [shape: f32[2,8,384], index: 3, kind: output, shape index: {}]
  %s4 = sld [smem:[#allocation0]]
  $region26: #{tpu_custom_call.1} parent=0
    _
  %s6 = ssub.s32 1, %s4
  %s7 = scalar_select 0, %s6, %s4
  $region1: #{tpu_custom_call.1} parent=0
    #allocation2 [shape = 'u8[16384]{0}', space=vmem, size = 0x4000, scoped, tag = 'input window, operand 0, single buffered']
    #allocation3 [shape = 's32[1]{0}', space=sflag, size = 0x4, scoped, tag = 'scoped memory for tpu_custom_call.1']
    #allocation4 [shape = 's32[1]{0}', space=sflag, size = 0x4, scoped, tag = 'scoped memory for tpu_custom_call.1']
    #allocation5 [shape = 'u8[24576]{0}', space=vmem, size = 0x6000, scoped, tag = 'output window, operand 0, single buffered']
    %8 = vsyncpa [#allocation3], 0
    %9 = vsyncpa [#allocation4], 0
    // Predicated region
    $region2: #{tpu_custom_call.1} parent=1 // pred_check
      _
    $region3: #{tpu_custom_call.1} parent=1 // pred_check_branch
      %11 = sbr.rel (0) target = $region5
    $region4: #{tpu_custom_call.1} parent=1 // pred_region
      %s13 = ssub.s32 512, 512
      %14 = vsyncadd [#allocation3], %s13
      %s15 = sshll.u32 [#allocation2], 4
      %s16 = int_to_ptr.vmem [resolvable:$true] %s15
      %21 = dma.hbm_to_vmem [thread:$0]  %s0, 512, %s16, [#allocation3], 256, 256, 16
    $region5: #{tpu_custom_call.1} parent=1 // pred_fallthru
      _
    // Predicated region
    $region6: #{tpu_custom_call.1} parent=1 // pred_check
      _
    $region7: #{tpu_custom_call.1} parent=1 // pred_check_branch
      %23 = sbr.rel (0) target = $region9
    $region8: #{tpu_custom_call.1} parent=1 // pred_region
      _
    $region9: #{tpu_custom_call.1} parent=1 // pred_fallthru
      _
    // Predicated region
    $region10: #{tpu_custom_call.1} parent=1 // pred_check
      _
    $region11: #{tpu_custom_call.1} parent=1 // pred_check_branch
      %25 = sbr.rel (0) target = $region13
    $region12: #{tpu_custom_call.1} parent=1 // pred_region
      _
    $region13: #{tpu_custom_call.1} parent=1 // pred_fallthru
      _
    // Predicated region
    $region14: #{tpu_custom_call.1} parent=1 // pred_check
      _
    $region15: #{tpu_custom_call.1} parent=1 // pred_check_branch
      %27 = sbr.rel (0) target = $region17
    $region16: #{tpu_custom_call.1} parent=1 // pred_region
      %28 = dma.done [#allocation3], 512
    $region17: #{tpu_custom_call.1} parent=1 // pred_fallthru
      _
    %v29 = vld [vmem:[#allocation2] sm:$0xff]
    %v30 = vld [vmem:[#allocation2 + $0x8] sm:$0xff]
    %s31 = scalar_lea.vmem [#allocation2], 16
    %v32 = vld [vmem:[%s31] sm:$0xff]
    %v33 = vld [vmem:[%s31 + $0x8] sm:$0xff]
    %v36 = vcombine.high %v29, %v29
    %v40 = vcombine.high %v32, %v32
    %v42 = vcombine.high %v30, %v30
    %43 = vrot.lane.b32.xlu0 %v29, 127
    %v44 = vpop.permute.xlu0 %43
    %45 = vrot.lane.b32.xlu0 %v36, 127
    %v46 = vpop.permute.xlu0 %45
    %47 = vrot.lane.b32.xlu0 %v30, 127
    %v48 = vpop.permute.xlu0 %47
    %49 = vrot.lane.b32.xlu0 %v42, 127
    %v50 = vpop.permute.xlu0 %49
    %vm51 = vcmask 1039360
    %v52 = vsel %vm51, %v44, %v46
    %v53 = vsel %vm51, %v46, %v48
    %v54 = vsel %vm51, %v48, %v50
    %v55 = vcombine.high %v33, %v33
    %56 = vrot.lane.b32.xlu0 %v32, 127
    %v57 = vpop.permute.xlu0 %56
    %58 = vrot.lane.b32.xlu0 %v40, 127
    %v59 = vpop.permute.xlu0 %58
    %60 = vrot.lane.b32.xlu0 %v33, 127
    %v61 = vpop.permute.xlu0 %60
    %62 = vrot.lane.b32.xlu0 %v55, 127
    %v63 = vpop.permute.xlu0 %62
    %v64 = vsel %vm51, %v57, %v59
    %v65 = vsel %vm51, %v59, %v61
    %v66 = vsel %vm51, %v61, %v63
    %67 = vrot.lane.b32.xlu0 %v29, 126
    %v68 = vpop.permute.xlu0 %67
    %69 = vrot.lane.b32.xlu0 %v36, 126
    %v70 = vpop.permute.xlu0 %69
    %71 = vrot.lane.b32.xlu0 %v30, 126
    %v72 = vpop.permute.xlu0 %71
    %73 = vrot.lane.b32.xlu0 %v42, 126
    %v74 = vpop.permute.xlu0 %73
    %vm75 = vcmask 1031168
    %v76 = vsel %vm75, %v68, %v70
    %v77 = vsel %vm75, %v70, %v72
    %v78 = vsel %vm75, %v72, %v74
    %82 = vrot.lane.b32.xlu0 %v32, 126
    %v83 = vpop.permute.xlu0 %82
    %84 = vrot.lane.b32.xlu0 %v40, 126
    %v85 = vpop.permute.xlu0 %84
    %86 = vrot.lane.b32.xlu0 %v33, 126
    %v87 = vpop.permute.xlu0 %86
    %88 = vrot.lane.b32.xlu0 %v55, 126
    %v89 = vpop.permute.xlu0 %88
    %v90 = vsel %vm75, %v83, %v85
    %v91 = vsel %vm75, %v85, %v87
    %v92 = vsel %vm75, %v87, %v89
    %96 = vrot.lane.b32.xlu0 %v29, 110
    %v97 = vpop.permute.xlu0 %96
    %98 = vrot.lane.b32.xlu0 %v36, 110
    %v99 = vpop.permute.xlu0 %98
    %100 = vrot.lane.b32.xlu0 %v30, 110
    %v101 = vpop.permute.xlu0 %100
    %102 = vrot.lane.b32.xlu0 %v42, 110
    %v103 = vpop.permute.xlu0 %102
    %vm104 = vcmask 900096
    %v105 = vsel %vm104, %v97, %v99
    %v106 = vsel %vm104, %v99, %v101
    %v107 = vsel %vm104, %v101, %v103
    %108 = vrot.lane.b32.xlu0 %v32, 110
    %v109 = vpop.permute.xlu0 %108
    %110 = vrot.lane.b32.xlu0 %v40, 110
    %v111 = vpop.permute.xlu0 %110
    %112 = vrot.lane.b32.xlu0 %v33, 110
    %v113 = vpop.permute.xlu0 %112
    %114 = vrot.lane.b32.xlu0 %v55, 110
    %v115 = vpop.permute.xlu0 %114
    %v116 = vsel %vm104, %v109, %v111
    %v117 = vsel %vm104, %v111, %v113
    %v118 = vsel %vm104, %v113, %v115
    %119 = vrot.lane.b32.xlu0 %v29, 109
    %v120 = vpop.permute.xlu0 %119
    %121 = vrot.lane.b32.xlu0 %v36, 109
    %v122 = vpop.permute.xlu0 %121
    %123 = vrot.lane.b32.xlu0 %v30, 109
    %v124 = vpop.permute.xlu0 %123
    %125 = vrot.lane.b32.xlu0 %v42, 109
    %v126 = vpop.permute.xlu0 %125
    %vm127 = vcmask 891904
    %v128 = vsel %vm127, %v120, %v122
    %v129 = vsel %vm127, %v122, %v124
    %v130 = vsel %vm127, %v124, %v126
    %134 = vrot.lane.b32.xlu0 %v32, 109
    %v135 = vpop.permute.xlu0 %134
    %136 = vrot.lane.b32.xlu0 %v40, 109
    %v137 = vpop.permute.xlu0 %136
    %138 = vrot.lane.b32.xlu0 %v33, 109
    %v139 = vpop.permute.xlu0 %138
    %140 = vrot.lane.b32.xlu0 %v55, 109
    %v141 = vpop.permute.xlu0 %140
    %v142 = vsel %vm127, %v135, %v137
    %v143 = vsel %vm127, %v137, %v139
    %v144 = vsel %vm127, %v139, %v141
    %148 = vrot.lane.b32.xlu0 %v29, 108
    %v149 = vpop.permute.xlu0 %148
    %150 = vrot.lane.b32.xlu0 %v36, 108
    %v151 = vpop.permute.xlu0 %150
    %152 = vrot.lane.b32.xlu0 %v30, 108
    %v153 = vpop.permute.xlu0 %152
    %154 = vrot.lane.b32.xlu0 %v42, 108
    %v155 = vpop.permute.xlu0 %154
    %vm156 = vcmask 883712
    %v157 = vsel %vm156, %v149, %v151
    %v158 = vsel %vm156, %v151, %v153
    %v159 = vsel %vm156, %v153, %v155
    %160 = vrot.lane.b32.xlu0 %v32, 108
    %v161 = vpop.permute.xlu0 %160
    %162 = vrot.lane.b32.xlu0 %v40, 108
    %v163 = vpop.permute.xlu0 %162
    %164 = vrot.lane.b32.xlu0 %v33, 108
    %v165 = vpop.permute.xlu0 %164
    %166 = vrot.lane.b32.xlu0 %v55, 108
    %v167 = vpop.permute.xlu0 %166
    %v168 = vsel %vm156, %v161, %v163
    %v169 = vsel %vm156, %v163, %v165
    %v170 = vsel %vm156, %v165, %v167
    %171 = vrot.lane.b32.xlu0 %v29, 92
    %v172 = vpop.permute.xlu0 %171
    %173 = vrot.lane.b32.xlu0 %v36, 92
    %v174 = vpop.permute.xlu0 %173
    %175 = vrot.lane.b32.xlu0 %v30, 92
    %v176 = vpop.permute.xlu0 %175
    %177 = vrot.lane.b32.xlu0 %v42, 92
    %v178 = vpop.permute.xlu0 %177
    %vm179 = vcmask 752640
    %v180 = vsel %vm179, %v172, %v174
    %v181 = vsel %vm179, %v174, %v176
    %v182 = vsel %vm179, %v176, %v178
    %186 = vrot.lane.b32.xlu0 %v32, 92
    %v187 = vpop.permute.xlu0 %186
    %188 = vrot.lane.b32.xlu0 %v40, 92
    %v189 = vpop.permute.xlu0 %188
    %190 = vrot.lane.b32.xlu0 %v33, 92
    %v191 = vpop.permute.xlu0 %190
    %192 = vrot.lane.b32.xlu0 %v55, 92
    %v193 = vpop.permute.xlu0 %192
    %v194 = vsel %vm179, %v187, %v189
    %v195 = vsel %vm179, %v189, %v191
    %v196 = vsel %vm179, %v191, %v193
    %200 = vrot.lane.b32.xlu0 %v29, 91
    %v201 = vpop.permute.xlu0 %200
    %202 = vrot.lane.b32.xlu0 %v36, 91
    %v203 = vpop.permute.xlu0 %202
    %204 = vrot.lane.b32.xlu0 %v30, 91
    %v205 = vpop.permute.xlu0 %204
    %206 = vrot.lane.b32.xlu0 %v42, 91
    %v207 = vpop.permute.xlu0 %206
    %vm208 = vcmask 744448
    %v209 = vsel %vm208, %v201, %v203
    %v210 = vsel %vm208, %v203, %v205
    %v211 = vsel %vm208, %v205, %v207
    %212 = vrot.lane.b32.xlu0 %v32, 91
    %v213 = vpop.permute.xlu0 %212
    %214 = vrot.lane.b32.xlu0 %v40, 91
    %v215 = vpop.permute.xlu0 %214
    %216 = vrot.lane.b32.xlu0 %v33, 91
    %v217 = vpop.permute.xlu0 %216
    %218 = vrot.lane.b32.xlu0 %v55, 91
    %v219 = vpop.permute.xlu0 %218
    %v220 = vsel %vm208, %v213, %v215
    %v221 = vsel %vm208, %v215, %v217
    %v222 = vsel %vm208, %v217, %v219
    %223 = vrot.lane.b32.xlu0 %v29, 90
    %v224 = vpop.permute.xlu0 %223
    %225 = vrot.lane.b32.xlu0 %v36, 90
    %v226 = vpop.permute.xlu0 %225
    %227 = vrot.lane.b32.xlu0 %v30, 90
    %v228 = vpop.permute.xlu0 %227
    %229 = vrot.lane.b32.xlu0 %v42, 90
    %v230 = vpop.permute.xlu0 %229
    %vm231 = vcmask 736256
    %v232 = vsel %vm231, %v224, %v226
    %v233 = vsel %vm231, %v226, %v228
    %v234 = vsel %vm231, %v228, %v230
    %235 = vrot.lane.b32.xlu0 %v32, 90
    %v236 = vpop.permute.xlu0 %235
    %237 = vrot.lane.b32.xlu0 %v40, 90
    %v238 = vpop.permute.xlu0 %237
    %239 = vrot.lane.b32.xlu0 %v33, 90
    %v240 = vpop.permute.xlu0 %239
    %241 = vrot.lane.b32.xlu0 %v55, 90
    %v242 = vpop.permute.xlu0 %241
    %v243 = vsel %vm231, %v236, %v238
    %v244 = vsel %vm231, %v238, %v240
    %v245 = vsel %vm231, %v240, %v242
    %v246 = vrot.slane %v52, 4
    %v247 = vrot.slane %v53, 4
    %v248 = vrot.slane %v54, 4
    %v249 = vrot.slane %v64, 4
    %v250 = vrot.slane %v65, 4
    %v251 = vrot.slane %v66, 4
    %v258 = vrot.slane %v105, 4
    %v259 = vrot.slane %v106, 4
    %v260 = vrot.slane %v107, 4
    %v261 = vrot.slane %v116, 4
    %v262 = vrot.slane %v117, 4
    %v263 = vrot.slane %v118, 4
    %v270 = vrot.slane %v157, 4
    %v271 = vrot.slane %v158, 4
    %v272 = vrot.slane %v159, 4
    %v273 = vrot.slane %v168, 4
    %v274 = vrot.slane %v169, 4
    %v275 = vrot.slane %v170, 4
    %v282 = vrot.slane %v209, 4
    %v283 = vrot.slane %v210, 4
    %v284 = vrot.slane %v211, 4
    %v285 = vrot.slane %v220, 4
    %v286 = vrot.slane %v221, 4
    %v287 = vrot.slane %v222, 4
    %vm294 = vcmask 1043456
    %v295 = vsel %vm294, %v29, %v246
    %v296 = vsel %vm294, %v36, %v247
    %v297 = vsel %vm294, %v30, %v248
    %v298 = vsel %vm294, %v32, %v249
    %v299 = vsel %vm294, %v40, %v250
    %v300 = vsel %vm294, %v33, %v251
    %v301 = vsel %vm294, %v76, %v258
    %v302 = vsel %vm294, %v77, %v259
    %v303 = vsel %vm294, %v78, %v260
    %v304 = vsel %vm294, %v90, %v261
    %v305 = vsel %vm294, %v91, %v262
    %v306 = vsel %vm294, %v92, %v263
    %v307 = vsel %vm294, %v128, %v270
    %v308 = vsel %vm294, %v129, %v271
    %v309 = vsel %vm294, %v130, %v272
    %v310 = vsel %vm294, %v142, %v273
    %v311 = vsel %vm294, %v143, %v274
    %v312 = vsel %vm294, %v144, %v275
    %v313 = vsel %vm294, %v180, %v282
    %v314 = vsel %vm294, %v181, %v283
    %v315 = vsel %vm294, %v182, %v284
    %v316 = vsel %vm294, %v194, %v285
    %v317 = vsel %vm294, %v195, %v286
    %v318 = vsel %vm294, %v196, %v287
    %v319 = vld [vmem:[%s1] sm:$0xff]
    %v320 = vld [vmem:[%s2] sm:$0xff]
    %322 = vset.pattern.permute.xlu0 0
    %323 = vperm.xlu0 %322, %v320
    %v324 = vpop.permute.xlu0 %323
    %vm326 = vcmask 293888
    %v328 = vsel %vm326, %v319, 0
    %v330 = vsel %vm294, %v232, 0
    %v332 = vsel %vm294, %v233, 0
    %v334 = vsel %vm294, %v234, 0
    %v336 = vsel %vm294, %v243, 0
    %v338 = vsel %vm294, %v244, 0
    %v340 = vsel %vm294, %v245, 0
    %342 = vmatprep.subr.mxu0 %v296
    %343 = vmatpush1.msra.mxu0 %v295
    %344 = vmatprep.subr.mxu0 %v302
    %345 = vmatpush1.msra.mxu0 %v301
    %346 = vmatprep.subr.mxu0 %v308
    %347 = vmatpush1.msra.mxu0 %v307
    %348 = vmatprep.subr.mxu0 %v314
    %349 = vmatpush1.msra.mxu0 %v313
    %350 = vmatprep.subr.mxu0 %v332
    %351 = vmatpush1.msra.mxu0 %v330
    %352 = vmatprep.subr.mxu0 0.0
    %353 = vmatpush1.msra.mxu0 0.0
    %354 = vmatprep.subr.mxu0 0.0
    %355 = vmatpush1.msra.mxu0 0.0
    %356 = vmatprep.subr.mxu0 0.0
    %357 = vmatpush1.msra.mxu0 0.0
    %358 = vmatprep.subr.mxu0 0.0
    %359 = vmatpush1.msra.mxu0 0.0
    %360 = vmatprep.subr.mxu0 0.0
    %361 = vmatpush1.msra.mxu0 0.0
    %362 = vmatprep.subr.mxu0 0.0
    %363 = vmatpush1.msra.mxu0 0.0
    %364 = vmatprep.subr.mxu0 0.0
    %365 = vmatpush1.msra.mxu0 0.0
    %366 = vmatprep.subr.mxu0 0.0
    %367 = vmatpush1.msra.mxu0 0.0
    %368 = vmatprep.subr.mxu0 0.0
    %369 = vmatpush1.msra.mxu0 0.0
    %370 = vmatprep.subr.mxu0 0.0
    %371 = vmatpush1.msra.mxu0 0.0
    %372 = vmatprep.subr.mxu0 0.0
    %373 = vmatpush1.msra.mxu0 0.0
    %374 = vmatprep.subr.mxu0 0.0
    %375 = vmatpush1.msra.mxu0 0.0
    %376 = vmatprep.subr.mxu0 0.0
    %377 = vmatpush1.msra.mxu0 0.0
    %378 = vmatprep.subr.mxu0 0.0
    %379 = vmatpush1.msra.mxu0 0.0
    %380 = vmatprep.subr.mxu0 0.0
    %381 = vmatpush1.msra.mxu0 0.0
    %382 = vmatprep.subr.mxu0 0.0
    %383 = vmatpush1.msra.mxu0 0.0
    %384 = vmatprep.subr.mxu0 0.0
    %385 = vmatpush1.msra.mxu0 0.0
    %386 = vmatprep.subr.mxu0 0.0
    %387 = vmatpush1.msra.mxu0 0.0
    %388 = vmatprep.subr.mxu0 0.0
    %389 = vmatpush1.msra.mxu0 0.0
    %390 = vmatprep.subr.mxu0 0.0
    %391 = vmatpush1.msra.mxu0 0.0
    %392 = vmatprep.subr.mxu0 0.0
    %393 = vmatpush1.msra.mxu0 0.0
    %394 = vmatprep.subr.mxu0 0.0
    %395 = vmatpush1.msra.mxu0 0.0
    %396 = vmatprep.subr.mxu0 0.0
    %397 = vmatpush1.msra.mxu0 0.0
    %398 = vmatprep.subr.mxu0 0.0
    %399 = vmatpush1.msra.mxu0 0.0
    %400 = vmatprep.subr.mxu0 0.0
    %401 = vmatpush1.msra.mxu0 0.0
    %402 = vmatprep.subr.mxu0 0.0
    %403 = vmatpush1.msra.mxu0 0.0
    %404 = vmatprep.subr.mxu0 0.0
    %405 = vmatpush1.msra.mxu0 0.0
    %406 = vmatprep.mubr.f32.mxu0 0.0
    %407 = vmatmul.mubr.f32.gmra.mrb[0].mxu0 %v328
    %v408 = vpop.f32.mrb[0].mxu0
    %v409 = vadd.f32 %v324, %v408
    %v410 = vpop.f32.mrb[0].mxu0
    %v411 = vadd.f32 %v324, %v410
    %412 = vdwg.mxu0
    %413 = vmatprep.subr.mxu0 %v298
    %414 = vmatpush1.msra.mxu0 %v297
    %415 = vmatprep.subr.mxu0 %v304
    %416 = vmatpush1.msra.mxu0 %v303
    %417 = vmatprep.subr.mxu0 %v310
    %418 = vmatpush1.msra.mxu0 %v309
    %419 = vmatprep.subr.mxu0 %v316
    %420 = vmatpush1.msra.mxu0 %v315
    %421 = vmatprep.subr.mxu0 %v336
    %422 = vmatpush1.msra.mxu0 %v334
    %423 = vmatprep.subr.mxu0 0.0
    %424 = vmatpush1.msra.mxu0 0.0
    %425 = vmatprep.subr.mxu0 0.0
    %426 = vmatpush1.msra.mxu0 0.0
    %427 = vmatprep.subr.mxu0 0.0
    %428 = vmatpush1.msra.mxu0 0.0
    %429 = vmatprep.subr.mxu0 0.0
    %430 = vmatpush1.msra.mxu0 0.0
    %431 = vmatprep.subr.mxu0 0.0
    %432 = vmatpush1.msra.mxu0 0.0
    %433 = vmatprep.subr.mxu0 0.0
    %434 = vmatpush1.msra.mxu0 0.0
    %435 = vmatprep.subr.mxu0 0.0
    %436 = vmatpush1.msra.mxu0 0.0
    %437 = vmatprep.subr.mxu0 0.0
    %438 = vmatpush1.msra.mxu0 0.0
    %439 = vmatprep.subr.mxu0 0.0
    %440 = vmatpush1.msra.mxu0 0.0
    %441 = vmatprep.subr.mxu0 0.0
    %442 = vmatpush1.msra.mxu0 0.0
    %443 = vmatprep.subr.mxu0 0.0
    %444 = vmatpush1.msra.mxu0 0.0
    %445 = vmatprep.subr.mxu0 0.0
    %446 = vmatpush1.msra.mxu0 0.0
    %447 = vmatprep.subr.mxu0 0.0
    %448 = vmatpush1.msra.mxu0 0.0
    %449 = vmatprep.subr.mxu0 0.0
    %450 = vmatpush1.msra.mxu0 0.0
    %451 = vmatprep.subr.mxu0 0.0
    %452 = vmatpush1.msra.mxu0 0.0
    %453 = vmatprep.subr.mxu0 0.0
    %454 = vmatpush1.msra.mxu0 0.0
    %455 = vmatprep.subr.mxu0 0.0
    %456 = vmatpush1.msra.mxu0 0.0
    %457 = vmatprep.subr.mxu0 0.0
    %458 = vmatpush1.msra.mxu0 0.0
    %459 = vmatprep.subr.mxu0 0.0
    %460 = vmatpush1.msra.mxu0 0.0
    %461 = vmatprep.subr.mxu0 0.0
    %462 = vmatpush1.msra.mxu0 0.0
    %463 = vmatprep.subr.mxu0 0.0
    %464 = vmatpush1.msra.mxu0 0.0
    %465 = vmatprep.subr.mxu0 0.0
    %466 = vmatpush1.msra.mxu0 0.0
    %467 = vmatprep.subr.mxu0 0.0
    %468 = vmatpush1.msra.mxu0 0.0
    %469 = vmatprep.subr.mxu0 0.0
    %470 = vmatpush1.msra.mxu0 0.0
    %471 = vmatprep.subr.mxu0 0.0
    %472 = vmatpush1.msra.mxu0 0.0
    %473 = vmatprep.subr.mxu0 0.0
    %474 = vmatpush1.msra.mxu0 0.0
    %475 = vmatprep.subr.mxu0 0.0
    %476 = vmatpush1.msra.mxu0 0.0
    %477 = vmatprep.mubr.f32.mxu0 0.0
    %478 = vmatmul.mubr.f32.gmra.mrb[0].mxu0 %v328
    %v479 = vpop.f32.mrb[0].mxu0
    %v480 = vadd.f32 %v324, %v479
    %v481 = vpop.f32.mrb[0].mxu0
    %v482 = vadd.f32 %v324, %v481
    %483 = vdwg.mxu0
    %484 = vmatprep.subr.mxu0 %v300
    %485 = vmatpush1.msra.mxu0 %v299
    %486 = vmatprep.subr.mxu0 %v306
    %487 = vmatpush1.msra.mxu0 %v305
    %488 = vmatprep.subr.mxu0 %v312
    %489 = vmatpush1.msra.mxu0 %v311
    %490 = vmatprep.subr.mxu0 %v318
    %491 = vmatpush1.msra.mxu0 %v317
    %492 = vmatprep.subr.mxu0 %v340
    %493 = vmatpush1.msra.mxu0 %v338
    %494 = vmatprep.subr.mxu0 0.0
    %495 = vmatpush1.msra.mxu0 0.0
    %496 = vmatprep.subr.mxu0 0.0
    %497 = vmatpush1.msra.mxu0 0.0
    %498 = vmatprep.subr.mxu0 0.0
    %499 = vmatpush1.msra.mxu0 0.0
    %500 = vmatprep.subr.mxu0 0.0
    %501 = vmatpush1.msra.mxu0 0.0
    %502 = vmatprep.subr.mxu0 0.0
    %503 = vmatpush1.msra.mxu0 0.0
    %504 = vmatprep.subr.mxu0 0.0
    %505 = vmatpush1.msra.mxu0 0.0
    %506 = vmatprep.subr.mxu0 0.0
    %507 = vmatpush1.msra.mxu0 0.0
    %508 = vmatprep.subr.mxu0 0.0
    %509 = vmatpush1.msra.mxu0 0.0
    %510 = vmatprep.subr.mxu0 0.0
    %511 = vmatpush1.msra.mxu0 0.0
    %512 = vmatprep.subr.mxu0 0.0
    %513 = vmatpush1.msra.mxu0 0.0
    %514 = vmatprep.subr.mxu0 0.0
    %515 = vmatpush1.msra.mxu0 0.0
    %516 = vmatprep.subr.mxu0 0.0
    %517 = vmatpush1.msra.mxu0 0.0
    %518 = vmatprep.subr.mxu0 0.0
    %519 = vmatpush1.msra.mxu0 0.0
    %520 = vmatprep.subr.mxu0 0.0
    %521 = vmatpush1.msra.mxu0 0.0
    %522 = vmatprep.subr.mxu0 0.0
    %523 = vmatpush1.msra.mxu0 0.0
    %524 = vmatprep.subr.mxu0 0.0
    %525 = vmatpush1.msra.mxu0 0.0
    %526 = vmatprep.subr.mxu0 0.0
    %527 = vmatpush1.msra.mxu0 0.0
    %528 = vmatprep.subr.mxu0 0.0
    %529 = vmatpush1.msra.mxu0 0.0
    %530 = vmatprep.subr.mxu0 0.0
    %531 = vmatpush1.msra.mxu0 0.0
    %532 = vmatprep.subr.mxu0 0.0
    %533 = vmatpush1.msra.mxu0 0.0
    %534 = vmatprep.subr.mxu0 0.0
    %535 = vmatpush1.msra.mxu0 0.0
    %536 = vmatprep.subr.mxu0 0.0
    %537 = vmatpush1.msra.mxu0 0.0
    %538 = vmatprep.subr.mxu0 0.0
    %539 = vmatpush1.msra.mxu0 0.0
    %540 = vmatprep.subr.mxu0 0.0
    %541 = vmatpush1.msra.mxu0 0.0
    %542 = vmatprep.subr.mxu0 0.0
    %543 = vmatpush1.msra.mxu0 0.0
    %544 = vmatprep.subr.mxu0 0.0
    %545 = vmatpush1.msra.mxu0 0.0
    %546 = vmatprep.subr.mxu0 0.0
    %547 = vmatpush1.msra.mxu0 0.0
    %548 = vmatprep.mubr.f32.mxu0 0.0
    %549 = vmatmul.mubr.f32.gmra.mrb[0].mxu0 %v328
    %v550 = vpop.f32.mrb[0].mxu0
    %v551 = vadd.f32 %v324, %v550
    %v552 = vpop.f32.mrb[0].mxu0
    %v553 = vadd.f32 %v324, %v552
    %554 = vdwg.mxu0
    %v555 = vmax.f32 %v409, 0.0
    %v556 = vmax.f32 %v411, 0.0
    %v557 = vmax.f32 %v480, 0.0
    %v558 = vmax.f32 %v482, 0.0
    %v559 = vmax.f32 %v551, 0.0
    %v560 = vmax.f32 %v553, 0.0
    %561 = vst [vmem:[#allocation5] sm:$0xff] %v555
    %562 = vst [vmem:[#allocation5 + $0x8] sm:$0xff] %v556
    %563 = vst [vmem:[#allocation5 + $0x10] sm:$0xff] %v557
    %s564 = scalar_lea.vmem [#allocation5], 24
    %565 = vst [vmem:[%s564] sm:$0xff] %v558
    %566 = vst [vmem:[%s564 + $0x8] sm:$0xff] %v559
    %567 = vst [vmem:[%s564 + $0x10] sm:$0xff] %v560
    // Predicated region
    $region18: #{tpu_custom_call.1} parent=1 // pred_check
      _
    $region19: #{tpu_custom_call.1} parent=1 // pred_check_branch
      %569 = sbr.rel (0) target = $region21
    $region20: #{tpu_custom_call.1} parent=1 // pred_region
      %s571 = ssub.s32 768, 768
      %572 = vsyncadd [#allocation4], %s571
      %s573 = sshll.u32 [#allocation5], 4
      %s574 = int_to_ptr.vmem [resolvable:$true] %s573
      %579 = dma.vmem_to_hbm [thread:$0]  %s574, 768, %s3, [#allocation4], 384, 384, 24
    $region21: #{tpu_custom_call.1} parent=1 // pred_fallthru
      _
    // Predicated region
    $region22: #{tpu_custom_call.1} parent=1 // pred_check
      _
    $region23: #{tpu_custom_call.1} parent=1 // pred_check_branch
      %581 = sbr.rel (0) target = $region25
    $region24: #{tpu_custom_call.1} parent=1 // pred_region
      %582 = dma.done [#allocation4], 768
    $region25: #{tpu_custom_call.1} parent=1 // pred_fallthru
      _
    %583 = vsyncpa [#allocation3], 1
    %584 = vsyncpa [#allocation4], 1

</llo_original>
